<compile_context>
chip_gen: v7x
topology: tpu7x:2x2x1
jax: 0.10.0
libtpu: 0.0.40
codegen_flags: <defaults>
</compile_context>

<pallas_src>
from functools import partial

import jax
import jax.numpy as jnp
import numpy as np
from jax.experimental import pallas as pl
from jax.experimental.pallas import tpu as pltpu

# ----- small, forward-consistent shapes -----
BATCH = 2
HORIZON = 8
OBS_DIM = 16
ACTION_DIM = 4
HIDDEN_DIM = 32            # inv_model hidden (declared by __init__, unused in forward)
MODEL_HIDDEN = 32          # synthetic velocity-model hidden
N_TOKENS = BATCH * HORIZON


def _midpoint_flow_kernel(x0_ref, base0_ref, basem_ref,
                          w1x_ref, w2_ref, b2_ref, out_ref):
    """Fused one-step midpoint ODE integration of the synthetic velocity MLP.

    x0_ref:    (N, OBS_DIM)       initial noise tokens
    base0_ref: (N, MODEL_HIDDEN)  cond@W1c + returns*w1r + b1          (t = 0 term folded away)
    basem_ref: (N, MODEL_HIDDEN)  base0 + 0.5*w1t                      (t = 0.5)
    """
    x0 = x0_ref[...]
    w1x = w1x_ref[...]
    w2 = w2_ref[...]
    b2 = b2_ref[...]

    def velocity(x, base):
        h = jnp.dot(x, w1x, preferred_element_type=jnp.float32) + base
        h = jnp.maximum(h, 0.0)                        # ReLU on VPU
        return jnp.dot(h, w2, preferred_element_type=jnp.float32) + b2

    k1 = velocity(x0, base0_ref[...])                  # v(t=0,   x0)
    x_mid = x0 + 0.5 * k1
    k2 = velocity(x_mid, basem_ref[...])               # v(t=0.5, x_mid)
    out_ref[...] = (x0 + k2).astype(out_ref.dtype)     # dt = 1.0


def midpoint_inference(x0_flat, base0_tok, base_mid_tok, params):
    """Single-invocation fused midpoint step.  All inputs live as full blocks in VMEM.

    x0_flat: (N, OBS), base0_tok/base_mid_tok: (N, MODEL_HIDDEN) -> (N, OBS).
    """
    n, obs = x0_flat.shape
    # TODO(synk): last dim is only 16 lanes; at realistic batch*horizon, reshape in the wrapper
    # to a lane-dense (>=128-wide) slab and reintroduce a row-tiled grid (tile >= 256 rows).
    return pl.pallas_call(
        _midpoint_flow_kernel,
        out_shape=jax.ShapeDtypeStruct((n, obs), jnp.float32),
    )(x0_flat, base0_tok, base_mid_tok, params["w1x"], params["w2"], params["b2"])


def init_params(key):
    ks = jax.random.split(key, 16)
    s = 0.1
    p = {
        # synthetic velocity model
        "w1x": s * jax.random.normal(ks[0], (OBS_DIM, MODEL_HIDDEN), jnp.float32),
        "w1c": s * jax.random.normal(ks[1], (OBS_DIM, MODEL_HIDDEN), jnp.float32),
        "w1t": s * jax.random.normal(ks[2], (1, MODEL_HIDDEN), jnp.float32),
        "w1r": s * jax.random.normal(ks[3], (1, MODEL_HIDDEN), jnp.float32),
        "b1": jnp.zeros((1, MODEL_HIDDEN), jnp.float32),
        "w2": s * jax.random.normal(ks[4], (MODEL_HIDDEN, OBS_DIM), jnp.float32),
        "b2": jnp.zeros((1, OBS_DIM), jnp.float32),
        # inv_model (Linear x4) -- declared by __init__ but NOT used in forward()
        "inv_w0": s * jax.random.normal(ks[5], (2 * OBS_DIM, HIDDEN_DIM), jnp.float32),
        "inv_b0": jnp.zeros((HIDDEN_DIM,), jnp.float32),
        "inv_w1": s * jax.random.normal(ks[6], (HIDDEN_DIM, HIDDEN_DIM), jnp.float32),
        "inv_b1": jnp.zeros((HIDDEN_DIM,), jnp.float32),
        "inv_w2": s * jax.random.normal(ks[7], (HIDDEN_DIM, HIDDEN_DIM), jnp.float32),
        "inv_b2": jnp.zeros((HIDDEN_DIM,), jnp.float32),
        "inv_w3": s * jax.random.normal(ks[8], (HIDDEN_DIM, ACTION_DIM), jnp.float32),
        "inv_b3": jnp.zeros((ACTION_DIM,), jnp.float32),
    }
    return p


def cond_ot_flow_matching_forward(params, cond, returns, key):
    """Equivalent of CondOTFlowMatching.forward(cond, returns) == inference(cond, returns)."""
    batch_size = cond[0].shape[0]
    # x0 ~ U[0,1), matching torch.rand(batch, horizon, obs_dim)
    x0 = jax.random.uniform(key, (batch_size, HORIZON, OBS_DIM), jnp.float32)
    x0_flat = x0.reshape(batch_size * HORIZON, OBS_DIM)   # row = b*HORIZON + h

    # Per-batch affine term of the first layer (x-independent), computed once as tiny XLA ops
    # instead of being redone HORIZON times per batch inside the kernel.
    base0 = cond[0] @ params["w1c"] + returns * params["w1r"] + params["b1"]   # (B, H)  t = 0
    base_mid = base0 + 0.5 * params["w1t"]                                     # (B, H)  t = 0.5
    base0_tok = jnp.repeat(base0, HORIZON, axis=0)                             # (N, H)
    base_mid_tok = jnp.repeat(base_mid, HORIZON, axis=0)                       # (N, H)

    x1_flat = midpoint_inference(x0_flat, base0_tok, base_mid_tok, params)
    return x1_flat.reshape(batch_size, HORIZON, OBS_DIM), x0


def _reference_forward(params, x0, cond, returns):
    """Pure-JAX reference of the same midpoint step, for correctness check."""
    def velocity(x, t_val):
        h = (x @ params["w1x"]
             + cond[0][:, None, :] @ params["w1c"]
             + returns[:, :, None] * params["w1r"]
             + t_val * params["w1t"] + params["b1"])
        h = jnp.maximum(h, 0.0)
        return h @ params["w2"] + params["b2"]
    k1 = velocity(x0, 0.0)
    x_mid = x0 + 0.5 * k1
    k2 = velocity(x_mid, 0.5)
    return x0 + k2


if __name__ == "__main__":
    root = jax.random.PRNGKey(0)
    k_param, k_cond, k_ret, k_x0 = jax.random.split(root, 4)

    params = init_params(k_param)
    cond = {0: jax.random.normal(k_cond, (BATCH, OBS_DIM), jnp.float32)}   # start-state cond
    returns = jax.random.normal(k_ret, (BATCH, 1), jnp.float32)

    out, x0_used = cond_ot_flow_matching_forward(params, cond, returns, k_x0)
    out = jax.block_until_ready(out)
    assert out.shape == (BATCH, HORIZON, OBS_DIM)

    ref = _reference_forward(params, x0_used, cond, returns)
    np.testing.assert_allclose(np.asarray(out), np.asarray(ref), rtol=1e-5, atol=1e-5)

    # TODO(synk): inv_model / loss paths are not part of forward(); only inference() is kernelized.
    print("KERNEL_OK")
</pallas_src>

<mosaic_0001>
module attributes {stable_mosaic.version = 11 : i64} {
  func.func @_midpoint_flow_kernel(%arg0: memref<16x16xf32, #tpu.memory_space<vmem>>, %arg1: memref<16x32xf32, #tpu.memory_space<vmem>>, %arg2: memref<16x32xf32, #tpu.memory_space<vmem>>, %arg3: memref<16x32xf32, #tpu.memory_space<vmem>>, %arg4: memref<32x16xf32, #tpu.memory_space<vmem>>, %arg5: memref<1x16xf32, #tpu.memory_space<vmem>>, %arg6: memref<16x16xf32, #tpu.memory_space<vmem>>) attributes {dimension_semantics = [], scalar_prefetch = 0 : i64, scratch_operands = 0 : i64, tpu.core_type = #tpu.core_type<tc>} {
    %c0 = arith.constant 0 : index
    %c0_0 = arith.constant 0 : index
    %0 = vector.load %arg0[%c0, %c0_0] : memref<16x16xf32, #tpu.memory_space<vmem>>, vector<16x16xf32>
    %c0_1 = arith.constant 0 : index
    %c0_2 = arith.constant 0 : index
    %1 = vector.load %arg3[%c0_1, %c0_2] : memref<16x32xf32, #tpu.memory_space<vmem>>, vector<16x32xf32>
    %c0_3 = arith.constant 0 : index
    %c0_4 = arith.constant 0 : index
    %2 = vector.load %arg4[%c0_3, %c0_4] : memref<32x16xf32, #tpu.memory_space<vmem>>, vector<32x16xf32>
    %c0_5 = arith.constant 0 : index
    %c0_6 = arith.constant 0 : index
    %3 = vector.load %arg5[%c0_5, %c0_6] : memref<1x16xf32, #tpu.memory_space<vmem>>, vector<1x16xf32>
    %c0_7 = arith.constant 0 : index
    %c0_8 = arith.constant 0 : index
    %4 = vector.load %arg1[%c0_7, %c0_8] : memref<16x32xf32, #tpu.memory_space<vmem>>, vector<16x32xf32>
    %cst = arith.constant dense<0.000000e+00> : vector<16x32xf32>
    %5 = tpu.matmul %0, %1, %cst {dimension_numbers = #tpu.dot_dimension_numbers<[1], [0], [0], [1], [0, 0, 1, 1], [], []>} : vector<16x16xf32>, vector<16x32xf32>, vector<16x32xf32> -> vector<16x32xf32>
    %6 = arith.addf %5, %4 : vector<16x32xf32>
    %cst_9 = arith.constant 0.000000e+00 : f32
    %7 = vector.broadcast %cst_9 : f32 to vector<16x32xf32>
    %8 = arith.maximumf %6, %7 : vector<16x32xf32>
    %cst_10 = arith.constant dense<0.000000e+00> : vector<16x16xf32>
    %9 = tpu.matmul %8, %2, %cst_10 {dimension_numbers = #tpu.dot_dimension_numbers<[1], [0], [0], [1], [0, 0, 1, 1], [], []>} : vector<16x32xf32>, vector<32x16xf32>, vector<16x16xf32> -> vector<16x16xf32>
    %10 = vector.broadcast %3 : vector<1x16xf32> to vector<16x16xf32>
    %11 = arith.addf %9, %10 : vector<16x16xf32>
    %cst_11 = arith.constant 5.000000e-01 : f32
    %12 = vector.broadcast %cst_11 : f32 to vector<16x16xf32>
    %13 = arith.mulf %12, %11 : vector<16x16xf32>
    %14 = arith.addf %0, %13 : vector<16x16xf32>
    %c0_12 = arith.constant 0 : index
    %c0_13 = arith.constant 0 : index
    %15 = vector.load %arg2[%c0_12, %c0_13] : memref<16x32xf32, #tpu.memory_space<vmem>>, vector<16x32xf32>
    %cst_14 = arith.constant dense<0.000000e+00> : vector<16x32xf32>
    %16 = tpu.matmul %14, %1, %cst_14 {dimension_numbers = #tpu.dot_dimension_numbers<[1], [0], [0], [1], [0, 0, 1, 1], [], []>} : vector<16x16xf32>, vector<16x32xf32>, vector<16x32xf32> -> vector<16x32xf32>
    %17 = arith.addf %16, %15 : vector<16x32xf32>
    %cst_15 = arith.constant 0.000000e+00 : f32
    %18 = vector.broadcast %cst_15 : f32 to vector<16x32xf32>
    %19 = arith.maximumf %17, %18 : vector<16x32xf32>
    %cst_16 = arith.constant dense<0.000000e+00> : vector<16x16xf32>
    %20 = tpu.matmul %19, %2, %cst_16 {dimension_numbers = #tpu.dot_dimension_numbers<[1], [0], [0], [1], [0, 0, 1, 1], [], []>} : vector<16x32xf32>, vector<32x16xf32>, vector<16x16xf32> -> vector<16x16xf32>
    %21 = vector.broadcast %3 : vector<1x16xf32> to vector<16x16xf32>
    %22 = arith.addf %20, %21 : vector<16x16xf32>
    %23 = arith.addf %0, %22 : vector<16x16xf32>
    %c0_17 = arith.constant 0 : index
    %c0_18 = arith.constant 0 : index
    %24 = vector.load %arg6[%c0_17, %c0_18] : memref<16x16xf32, #tpu.memory_space<vmem>>, vector<16x16xf32>
    tpu.vector_store %arg6[%c0_17, %c0_18], %23 {strides = array<i32>} : memref<16x16xf32, #tpu.memory_space<vmem>>, vector<16x16xf32>,
    return
  }
}

</mosaic_0001>

<llo_original>
// kernel: tpu_custom_call.1
$region0: #{tpu_custom_call.1}
  #allocation0 [shape = 'u32[]', space=smem, size = 0x4, offset = 0x4, fixed_abs, tag = 'smem constant byte address 0x4 - core index']
  #allocation1 [shape = 'u32[144,128]{1,0:T(1,128)}', space=vmem, size = 0x12000, scoped, tag = 'internal scratch']
  %s0 = inlined_call_operand.vmem [shape: f32[16,16], index: 0, kind: input, shape index: {}]
  %s1 = inlined_call_operand.vmem [shape: f32[16,32], index: 1, kind: input, shape index: {}]
  %s2 = inlined_call_operand.vmem [shape: f32[16,32], index: 2, kind: input, shape index: {}]
  %s3 = inlined_call_operand.hbm [shape: f32[16,32], index: 3, kind: input, shape index: {}]
  %s4 = inlined_call_operand.vmem [shape: f32[32,16], index: 4, kind: input, shape index: {}]
  %s5 = inlined_call_operand.vmem [shape: f32[1,16], index: 5, kind: input, shape index: {}]
  %s6 = inlined_call_operand.hbm [shape: f32[16,16], index: 6, kind: output, shape index: {}]
  %s7 = sld [smem:[#allocation0]]
  $region38: #{tpu_custom_call.1} parent=0
    _
  %s9 = ssub.s32 1, %s7
  %s10 = scalar_select 0, %s9, %s7
  $region1: #{tpu_custom_call.1} parent=0
    #allocation2 [shape = 'u8[8192]{0}', space=vmem, size = 0x2000, scoped, tag = 'input window, operand 3, single buffered']
    #allocation3 [shape = 's32[1]{0}', space=sflag, size = 0x4, scoped, tag = 'scoped memory for tpu_custom_call.1']
    #allocation4 [shape = 's32[1]{0}', space=sflag, size = 0x4, scoped, tag = 'scoped memory for tpu_custom_call.1']
    #allocation5 [shape = 'u8[8192]{0}', space=vmem, size = 0x2000, scoped, tag = 'output window, operand 0, single buffered']
    %11 = vsyncpa [#allocation3], 0
    %12 = vsyncpa [#allocation4], 0
    // Predicated region
    $region2: #{tpu_custom_call.1} parent=1 // pred_check
      _
    $region3: #{tpu_custom_call.1} parent=1 // pred_check_branch
      %14 = sbr.rel (0) target = $region5
    $region4: #{tpu_custom_call.1} parent=1 // pred_region
      _
    $region5: #{tpu_custom_call.1} parent=1 // pred_fallthru
      _
    // Predicated region
    $region6: #{tpu_custom_call.1} parent=1 // pred_check
      _
    $region7: #{tpu_custom_call.1} parent=1 // pred_check_branch
      %16 = sbr.rel (0) target = $region9
    $region8: #{tpu_custom_call.1} parent=1 // pred_region
      _
    $region9: #{tpu_custom_call.1} parent=1 // pred_fallthru
      _
    // Predicated region
    $region10: #{tpu_custom_call.1} parent=1 // pred_check
      _
    $region11: #{tpu_custom_call.1} parent=1 // pred_check_branch
      %18 = sbr.rel (0) target = $region13
    $region12: #{tpu_custom_call.1} parent=1 // pred_region
      _
    $region13: #{tpu_custom_call.1} parent=1 // pred_fallthru
      _
    // Predicated region
    $region14: #{tpu_custom_call.1} parent=1 // pred_check
      _
    $region15: #{tpu_custom_call.1} parent=1 // pred_check_branch
      %20 = sbr.rel (0) target = $region17
    $region16: #{tpu_custom_call.1} parent=1 // pred_region
      %s22 = ssub.s32 256, 256
      %23 = vsyncadd [#allocation3], %s22
      %s24 = sshll.u32 [#allocation2], 4
      %s25 = int_to_ptr.vmem [resolvable:$true] %s24
      %30 = dma.hbm_to_vmem [thread:$0]  %s3, 256, %s25, [#allocation3], 128, 128, 8
    $region17: #{tpu_custom_call.1} parent=1 // pred_fallthru
      _
    // Predicated region
    $region18: #{tpu_custom_call.1} parent=1 // pred_check
      _
    $region19: #{tpu_custom_call.1} parent=1 // pred_check_branch
      %32 = sbr.rel (0) target = $region21
    $region20: #{tpu_custom_call.1} parent=1 // pred_region
      _
    $region21: #{tpu_custom_call.1} parent=1 // pred_fallthru
      _
    // Predicated region
    $region22: #{tpu_custom_call.1} parent=1 // pred_check
      _
    $region23: #{tpu_custom_call.1} parent=1 // pred_check_branch
      %34 = sbr.rel (0) target = $region25
    $region24: #{tpu_custom_call.1} parent=1 // pred_region
      _
    $region25: #{tpu_custom_call.1} parent=1 // pred_fallthru
      _
    // Predicated region
    $region26: #{tpu_custom_call.1} parent=1 // pred_check
      _
    $region27: #{tpu_custom_call.1} parent=1 // pred_check_branch
      %36 = sbr.rel (0) target = $region29
    $region28: #{tpu_custom_call.1} parent=1 // pred_region
      %37 = dma.done [#allocation3], 256
    $region29: #{tpu_custom_call.1} parent=1 // pred_fallthru
      _
    %v38 = vld [vmem:[%s0] sm:$0xff]
    %v39 = vld [vmem:[%s0 + $0x8] sm:$0xff]
    %v40 = vld [vmem:[#allocation2] sm:$0xff]
    %v41 = vld [vmem:[#allocation2 + $0x8] sm:$0xff]
    %v42 = vld [vmem:[%s4] sm:$0xff]
    %v43 = vld [vmem:[%s4 + $0x8] sm:$0xff]
    %v44 = vld [vmem:[%s4 + $0x10] sm:$0xff]
    %v45 = vld [vmem:[%s4 + $0x18] sm:$0xff]
    %v46 = vld [vmem:[%s5] sm:$0x1]
    %v47 = vld [vmem:[%s1] sm:$0xff]
    %v48 = vld [vmem:[%s1 + $0x8] sm:$0xff]
    %vm49 = vcmask 130048
    %v51 = vsel %vm49, %v38, 0
    %v54 = vsel %vm49, %v39, 0
    %56 = vmatprep.subr.mxu0 0.0
    %57 = vmatpush1.msra.mxu0 %v40
    %58 = vmatprep.subr.mxu0 0.0
    %59 = vmatpush1.msra.mxu0 %v41
    %60 = vmatprep.subr.mxu0 0.0
    %61 = vmatpush1.msra.mxu0 0.0
    %62 = vmatprep.subr.mxu0 0.0
    %63 = vmatpush1.msra.mxu0 0.0
    %64 = vmatprep.subr.mxu0 0.0
    %65 = vmatpush1.msra.mxu0 0.0
    %66 = vmatprep.subr.mxu0 0.0
    %67 = vmatpush1.msra.mxu0 0.0
    %68 = vmatprep.subr.mxu0 0.0
    %69 = vmatpush1.msra.mxu0 0.0
    %70 = vmatprep.subr.mxu0 0.0
    %71 = vmatpush1.msra.mxu0 0.0
    %72 = vmatprep.subr.mxu0 0.0
    %73 = vmatpush1.msra.mxu0 0.0
    %74 = vmatprep.subr.mxu0 0.0
    %75 = vmatpush1.msra.mxu0 0.0
    %76 = vmatprep.subr.mxu0 0.0
    %77 = vmatpush1.msra.mxu0 0.0
    %78 = vmatprep.subr.mxu0 0.0
    %79 = vmatpush1.msra.mxu0 0.0
    %80 = vmatprep.subr.mxu0 0.0
    %81 = vmatpush1.msra.mxu0 0.0
    %82 = vmatprep.subr.mxu0 0.0
    %83 = vmatpush1.msra.mxu0 0.0
    %84 = vmatprep.subr.mxu0 0.0
    %85 = vmatpush1.msra.mxu0 0.0
    %86 = vmatprep.subr.mxu0 0.0
    %87 = vmatpush1.msra.mxu0 0.0
    %88 = vmatprep.subr.mxu0 0.0
    %89 = vmatpush1.msra.mxu0 0.0
    %90 = vmatprep.subr.mxu0 0.0
    %91 = vmatpush1.msra.mxu0 0.0
    %92 = vmatprep.subr.mxu0 0.0
    %93 = vmatpush1.msra.mxu0 0.0
    %94 = vmatprep.subr.mxu0 0.0
    %95 = vmatpush1.msra.mxu0 0.0
    %96 = vmatprep.subr.mxu0 0.0
    %97 = vmatpush1.msra.mxu0 0.0
    %98 = vmatprep.subr.mxu0 0.0
    %99 = vmatpush1.msra.mxu0 0.0
    %100 = vmatprep.subr.mxu0 0.0
    %101 = vmatpush1.msra.mxu0 0.0
    %102 = vmatprep.subr.mxu0 0.0
    %103 = vmatpush1.msra.mxu0 0.0
    %104 = vmatprep.subr.mxu0 0.0
    %105 = vmatpush1.msra.mxu0 0.0
    %106 = vmatprep.subr.mxu0 0.0
    %107 = vmatpush1.msra.mxu0 0.0
    %108 = vmatprep.subr.mxu0 0.0
    %109 = vmatpush1.msra.mxu0 0.0
    %110 = vmatprep.subr.mxu0 0.0
    %111 = vmatpush1.msra.mxu0 0.0
    %112 = vmatprep.subr.mxu0 0.0
    %113 = vmatpush1.msra.mxu0 0.0
    %114 = vmatprep.subr.mxu0 0.0
    %115 = vmatpush1.msra.mxu0 0.0
    %116 = vmatprep.subr.mxu0 0.0
    %117 = vmatpush1.msra.mxu0 0.0
    %118 = vmatprep.subr.mxu0 0.0
    %119 = vmatpush1.msra.mxu0 0.0
    %120 = vmatprep.mubr.f32.mxu0 0.0
    %121 = vmatmul.mubr.f32.gmra.mrb[0].mxu0 %v51
    %v122 = vpop.f32.mrb[0].mxu0
    %v123 = vadd.f32 %v47, %v122
    %v124 = vpop.f32.mrb[0].mxu0
    %125 = vmatprep.mubr.f32.mxu0 0.0
    %126 = vmatmul.mubr.f32.gmra.mrb[0].mxu0 %v54
    %v127 = vpop.f32.mrb[0].mxu0
    %v128 = vadd.f32 %v48, %v127
    %v129 = vpop.f32.mrb[0].mxu0
    %130 = vdwg.mxu0
    %v131 = vmax.f32 %v123, 0.0
    %v132 = vmax.f32 %v128, 0.0
    %v134 = vlaneseq
    %v135 = vshrl.u32 %v134, 7
    %v136 = vsub.s32 0, %v135
    %v137 = vrot.slane %v46, %v136
    %vm139 = vcmask 261120
    %v141 = vsel %vm139, %v131, 0
    %v144 = vsel %vm139, %v132, 0
    %146 = vmatprep.subr.mxu0 0.0
    %147 = vmatpush1.msra.mxu0 %v42
    %148 = vmatprep.subr.mxu0 0.0
    %149 = vmatpush1.msra.mxu0 %v43
    %150 = vmatprep.subr.mxu0 0.0
    %151 = vmatpush1.msra.mxu0 %v44
    %152 = vmatprep.subr.mxu0 0.0
    %153 = vmatpush1.msra.mxu0 %v45
    %154 = vmatprep.subr.mxu0 0.0
    %155 = vmatpush1.msra.mxu0 0.0
    %156 = vmatprep.subr.mxu0 0.0
    %157 = vmatpush1.msra.mxu0 0.0
    %158 = vmatprep.subr.mxu0 0.0
    %159 = vmatpush1.msra.mxu0 0.0
    %160 = vmatprep.subr.mxu0 0.0
    %161 = vmatpush1.msra.mxu0 0.0
    %162 = vmatprep.subr.mxu0 0.0
    %163 = vmatpush1.msra.mxu0 0.0
    %164 = vmatprep.subr.mxu0 0.0
    %165 = vmatpush1.msra.mxu0 0.0
    %166 = vmatprep.subr.mxu0 0.0
    %167 = vmatpush1.msra.mxu0 0.0
    %168 = vmatprep.subr.mxu0 0.0
    %169 = vmatpush1.msra.mxu0 0.0
    %170 = vmatprep.subr.mxu0 0.0
    %171 = vmatpush1.msra.mxu0 0.0
    %172 = vmatprep.subr.mxu0 0.0
    %173 = vmatpush1.msra.mxu0 0.0
    %174 = vmatprep.subr.mxu0 0.0
    %175 = vmatpush1.msra.mxu0 0.0
    %176 = vmatprep.subr.mxu0 0.0
    %177 = vmatpush1.msra.mxu0 0.0
    %178 = vmatprep.subr.mxu0 0.0
    %179 = vmatpush1.msra.mxu0 0.0
    %180 = vmatprep.subr.mxu0 0.0
    %181 = vmatpush1.msra.mxu0 0.0
    %182 = vmatprep.subr.mxu0 0.0
    %183 = vmatpush1.msra.mxu0 0.0
    %184 = vmatprep.subr.mxu0 0.0
    %185 = vmatpush1.msra.mxu0 0.0
    %186 = vmatprep.subr.mxu0 0.0
    %187 = vmatpush1.msra.mxu0 0.0
    %188 = vmatprep.subr.mxu0 0.0
    %189 = vmatpush1.msra.mxu0 0.0
    %190 = vmatprep.subr.mxu0 0.0
    %191 = vmatpush1.msra.mxu0 0.0
    %192 = vmatprep.subr.mxu0 0.0
    %193 = vmatpush1.msra.mxu0 0.0
    %194 = vmatprep.subr.mxu0 0.0
    %195 = vmatpush1.msra.mxu0 0.0
    %196 = vmatprep.subr.mxu0 0.0
    %197 = vmatpush1.msra.mxu0 0.0
    %198 = vmatprep.subr.mxu0 0.0
    %199 = vmatpush1.msra.mxu0 0.0
    %200 = vmatprep.subr.mxu0 0.0
    %201 = vmatpush1.msra.mxu0 0.0
    %202 = vmatprep.subr.mxu0 0.0
    %203 = vmatpush1.msra.mxu0 0.0
    %204 = vmatprep.subr.mxu0 0.0
    %205 = vmatpush1.msra.mxu0 0.0
    %206 = vmatprep.subr.mxu0 0.0
    %207 = vmatpush1.msra.mxu0 0.0
    %208 = vmatprep.subr.mxu0 0.0
    %209 = vmatpush1.msra.mxu0 0.0
    %210 = vmatprep.mubr.f32.mxu0 0.0
    %211 = vmatmul.mubr.f32.gmra.mrb[0].mxu0 %v141
    %v212 = vpop.f32.mrb[0].mxu0
    %v213 = vadd.f32 %v137, %v212
    %v214 = vpop.f32.mrb[0].mxu0
    %215 = vmatprep.mubr.f32.mxu0 0.0
    %216 = vmatmul.mubr.f32.gmra.mrb[0].mxu0 %v144
    %v217 = vpop.f32.mrb[0].mxu0
    %v218 = vadd.f32 %v137, %v217
    %v219 = vpop.f32.mrb[0].mxu0
    %220 = vdwg.mxu0
    %v221 = vmul.f32 %v213, 0.5
    %v222 = vmul.f32 %v218, 0.5
    %v223 = vadd.f32 %v38, %v221
    %v224 = vadd.f32 %v39, %v222
    %v225 = vld [vmem:[%s2] sm:$0xff]
    %v226 = vld [vmem:[%s2 + $0x8] sm:$0xff]
    %v228 = vsel %vm49, %v223, 0
    %v231 = vsel %vm49, %v224, 0
    %233 = vmatprep.subr.mxu0 0.0
    %234 = vmatpush1.msra.mxu0 %v40
    %235 = vmatprep.subr.mxu0 0.0
    %236 = vmatpush1.msra.mxu0 %v41
    %237 = vmatprep.subr.mxu0 0.0
    %238 = vmatpush1.msra.mxu0 0.0
    %239 = vmatprep.subr.mxu0 0.0
    %240 = vmatpush1.msra.mxu0 0.0
    %241 = vmatprep.subr.mxu0 0.0
    %242 = vmatpush1.msra.mxu0 0.0
    %243 = vmatprep.subr.mxu0 0.0
    %244 = vmatpush1.msra.mxu0 0.0
    %245 = vmatprep.subr.mxu0 0.0
    %246 = vmatpush1.msra.mxu0 0.0
    %247 = vmatprep.subr.mxu0 0.0
    %248 = vmatpush1.msra.mxu0 0.0
    %249 = vmatprep.subr.mxu0 0.0
    %250 = vmatpush1.msra.mxu0 0.0
    %251 = vmatprep.subr.mxu0 0.0
    %252 = vmatpush1.msra.mxu0 0.0
    %253 = vmatprep.subr.mxu0 0.0
    %254 = vmatpush1.msra.mxu0 0.0
    %255 = vmatprep.subr.mxu0 0.0
    %256 = vmatpush1.msra.mxu0 0.0
    %257 = vmatprep.subr.mxu0 0.0
    %258 = vmatpush1.msra.mxu0 0.0
    %259 = vmatprep.subr.mxu0 0.0
    %260 = vmatpush1.msra.mxu0 0.0
    %261 = vmatprep.subr.mxu0 0.0
    %262 = vmatpush1.msra.mxu0 0.0
    %263 = vmatprep.subr.mxu0 0.0
    %264 = vmatpush1.msra.mxu0 0.0
    %265 = vmatprep.subr.mxu0 0.0
    %266 = vmatpush1.msra.mxu0 0.0
    %267 = vmatprep.subr.mxu0 0.0
    %268 = vmatpush1.msra.mxu0 0.0
    %269 = vmatprep.subr.mxu0 0.0
    %270 = vmatpush1.msra.mxu0 0.0
    %271 = vmatprep.subr.mxu0 0.0
    %272 = vmatpush1.msra.mxu0 0.0
    %273 = vmatprep.subr.mxu0 0.0
    %274 = vmatpush1.msra.mxu0 0.0
    %275 = vmatprep.subr.mxu0 0.0
    %276 = vmatpush1.msra.mxu0 0.0
    %277 = vmatprep.subr.mxu0 0.0
    %278 = vmatpush1.msra.mxu0 0.0
    %279 = vmatprep.subr.mxu0 0.0
    %280 = vmatpush1.msra.mxu0 0.0
    %281 = vmatprep.subr.mxu0 0.0
    %282 = vmatpush1.msra.mxu0 0.0
    %283 = vmatprep.subr.mxu0 0.0
    %284 = vmatpush1.msra.mxu0 0.0
    %285 = vmatprep.subr.mxu0 0.0
    %286 = vmatpush1.msra.mxu0 0.0
    %287 = vmatprep.subr.mxu0 0.0
    %288 = vmatpush1.msra.mxu0 0.0
    %289 = vmatprep.subr.mxu0 0.0
    %290 = vmatpush1.msra.mxu0 0.0
    %291 = vmatprep.subr.mxu0 0.0
    %292 = vmatpush1.msra.mxu0 0.0
    %293 = vmatprep.subr.mxu0 0.0
    %294 = vmatpush1.msra.mxu0 0.0
    %295 = vmatprep.subr.mxu0 0.0
    %296 = vmatpush1.msra.mxu0 0.0
    %297 = vmatprep.mubr.f32.mxu0 0.0
    %298 = vmatmul.mubr.f32.gmra.mrb[0].mxu0 %v228
    %v299 = vpop.f32.mrb[0].mxu0
    %v300 = vadd.f32 %v225, %v299
    %v301 = vpop.f32.mrb[0].mxu0
    %302 = vmatprep.mubr.f32.mxu0 0.0
    %303 = vmatmul.mubr.f32.gmra.mrb[0].mxu0 %v231
    %v304 = vpop.f32.mrb[0].mxu0
    %v305 = vadd.f32 %v226, %v304
    %v306 = vpop.f32.mrb[0].mxu0
    %307 = vdwg.mxu0
    %v308 = vmax.f32 %v300, 0.0
    %v309 = vmax.f32 %v305, 0.0
    %v311 = vsel %vm139, %v308, 0
    %v314 = vsel %vm139, %v309, 0
    %316 = vmatprep.subr.mxu0 0.0
    %317 = vmatpush1.msra.mxu0 %v42
    %318 = vmatprep.subr.mxu0 0.0
    %319 = vmatpush1.msra.mxu0 %v43
    %320 = vmatprep.subr.mxu0 0.0
    %321 = vmatpush1.msra.mxu0 %v44
    %322 = vmatprep.subr.mxu0 0.0
    %323 = vmatpush1.msra.mxu0 %v45
    %324 = vmatprep.subr.mxu0 0.0
    %325 = vmatpush1.msra.mxu0 0.0
    %326 = vmatprep.subr.mxu0 0.0
    %327 = vmatpush1.msra.mxu0 0.0
    %328 = vmatprep.subr.mxu0 0.0
    %329 = vmatpush1.msra.mxu0 0.0
    %330 = vmatprep.subr.mxu0 0.0
    %331 = vmatpush1.msra.mxu0 0.0
    %332 = vmatprep.subr.mxu0 0.0
    %333 = vmatpush1.msra.mxu0 0.0
    %334 = vmatprep.subr.mxu0 0.0
    %335 = vmatpush1.msra.mxu0 0.0
    %336 = vmatprep.subr.mxu0 0.0
    %337 = vmatpush1.msra.mxu0 0.0
    %338 = vmatprep.subr.mxu0 0.0
    %339 = vmatpush1.msra.mxu0 0.0
    %340 = vmatprep.subr.mxu0 0.0
    %341 = vmatpush1.msra.mxu0 0.0
    %342 = vmatprep.subr.mxu0 0.0
    %343 = vmatpush1.msra.mxu0 0.0
    %344 = vmatprep.subr.mxu0 0.0
    %345 = vmatpush1.msra.mxu0 0.0
    %346 = vmatprep.subr.mxu0 0.0
    %347 = vmatpush1.msra.mxu0 0.0
    %348 = vmatprep.subr.mxu0 0.0
    %349 = vmatpush1.msra.mxu0 0.0
    %350 = vmatprep.subr.mxu0 0.0
    %351 = vmatpush1.msra.mxu0 0.0
    %352 = vmatprep.subr.mxu0 0.0
    %353 = vmatpush1.msra.mxu0 0.0
    %354 = vmatprep.subr.mxu0 0.0
    %355 = vmatpush1.msra.mxu0 0.0
    %356 = vmatprep.subr.mxu0 0.0
    %357 = vmatpush1.msra.mxu0 0.0
    %358 = vmatprep.subr.mxu0 0.0
    %359 = vmatpush1.msra.mxu0 0.0
    %360 = vmatprep.subr.mxu0 0.0
    %361 = vmatpush1.msra.mxu0 0.0
    %362 = vmatprep.subr.mxu0 0.0
    %363 = vmatpush1.msra.mxu0 0.0
    %364 = vmatprep.subr.mxu0 0.0
    %365 = vmatpush1.msra.mxu0 0.0
    %366 = vmatprep.subr.mxu0 0.0
    %367 = vmatpush1.msra.mxu0 0.0
    %368 = vmatprep.subr.mxu0 0.0
    %369 = vmatpush1.msra.mxu0 0.0
    %370 = vmatprep.subr.mxu0 0.0
    %371 = vmatpush1.msra.mxu0 0.0
    %372 = vmatprep.subr.mxu0 0.0
    %373 = vmatpush1.msra.mxu0 0.0
    %374 = vmatprep.subr.mxu0 0.0
    %375 = vmatpush1.msra.mxu0 0.0
    %376 = vmatprep.subr.mxu0 0.0
    %377 = vmatpush1.msra.mxu0 0.0
    %378 = vmatprep.subr.mxu0 0.0
    %379 = vmatpush1.msra.mxu0 0.0
    %380 = vmatprep.mubr.f32.mxu0 0.0
    %381 = vmatmul.mubr.f32.gmra.mrb[0].mxu0 %v311
    %v382 = vpop.f32.mrb[0].mxu0
    %v383 = vadd.f32 %v137, %v382
    %v384 = vpop.f32.mrb[0].mxu0
    %385 = vmatprep.mubr.f32.mxu0 0.0
    %386 = vmatmul.mubr.f32.gmra.mrb[0].mxu0 %v314
    %v387 = vpop.f32.mrb[0].mxu0
    %v388 = vadd.f32 %v137, %v387
    %v389 = vpop.f32.mrb[0].mxu0
    %390 = vdwg.mxu0
    %v391 = vadd.f32 %v38, %v383
    %v392 = vadd.f32 %v39, %v388
    %393 = vst.msk [vmem:[#allocation5] sm:$0xff] %vm49, %v391
    %394 = vst.msk [vmem:[#allocation5 + $0x8] sm:$0xff] %vm49, %v392
    // Predicated region
    $region30: #{tpu_custom_call.1} parent=1 // pred_check
      _
    $region31: #{tpu_custom_call.1} parent=1 // pred_check_branch
      %396 = sbr.rel (0) target = $region33
    $region32: #{tpu_custom_call.1} parent=1 // pred_region
      %s398 = ssub.s32 256, 256
      %399 = vsyncadd [#allocation4], %s398
      %s400 = sshll.u32 [#allocation5], 4
      %s401 = int_to_ptr.vmem [resolvable:$true] %s400
      %406 = dma.vmem_to_hbm [thread:$0]  %s401, 256, %s6, [#allocation4], 128, 128, 8
    $region33: #{tpu_custom_call.1} parent=1 // pred_fallthru
      _
    // Predicated region
    $region34: #{tpu_custom_call.1} parent=1 // pred_check
      _
    $region35: #{tpu_custom_call.1} parent=1 // pred_check_branch
      %408 = sbr.rel (0) target = $region37
    $region36: #{tpu_custom_call.1} parent=1 // pred_region
      %409 = dma.done [#allocation4], 256
    $region37: #{tpu_custom_call.1} parent=1 // pred_fallthru
      _
    %410 = vsyncpa [#allocation3], 1
    %411 = vsyncpa [#allocation4], 1

</llo_original>
